<compile_context>
chip_gen: v7x
topology: tpu7x:2x2x1
jax: 0.10.0
libtpu: 0.0.40
codegen_flags: <defaults>
</compile_context>

<pallas_src>
import jax
import jax.numpy as jnp
from jax import lax
from jax.experimental import pallas as pl
from jax.experimental.pallas import tpu as pltpu

VOCAB_SIZE = 16
SEQ_LEN = 65            # 64 board squares + 1 special token
_VMEM_TILE_BUDGET = 12 * 1024 * 1024   # output(2x) + pos slab + token tiles
_VMEM_LIMIT_BYTES = 32 * 1024 * 1024   # safe on v5e/v6e (128 MiB) and v7x (64 MiB)


def board_embedder_kernel(tok_ref, table_ref, pos_ref, out_ref):
    """One grid step = one batch tile of `block_b` boards, flattened to rows.

    tok_ref:   (block_b*65, 1)  int32   token id per row (blocked per step)
    table_ref: (16, D)          float32 piece embedding table (resident)
    pos_ref:   (block_b*65, D)  float32 pre-tiled positional slab (resident)
    out_ref:   (block_b*65, D)  float32 output tile
    """
    rows = tok_ref.shape[0]
    k, _ = table_ref.shape

    # Piece-only one-hot: (rows, 16).  Out-of-range tokens -> all-zero row.
    col = lax.broadcasted_iota(jnp.int32, (rows, k), 1)
    onehot = (col == tok_ref[...]).astype(jnp.float32)

    # One MXU matmul gathers the piece embeddings; one VPU add applies the
    # batch-invariant positional slab.  Single dense store.
    emb = jnp.dot(onehot, table_ref[...], preferred_element_type=jnp.float32)
    out_ref[...] = (emb + pos_ref[...]).astype(out_ref.dtype)


def _pick_block_b(batch: int, embed_dim: int) -> int:
    """Pick a batch tile: multiple of 8 (sublane rule) or the full batch."""
    # Per-board VMEM cost of one step: double-buffered output rows + resident
    # pos-slab rows (width D, f32) + double-buffered lane-padded token rows.
    bytes_per_board = SEQ_LEN * (3 * embed_dim * 4 + 2 * 128 * 4)
    if batch % 8 != 0:
        return batch                      # full-extent block is the only legal tile
    fits = _VMEM_TILE_BUDGET // bytes_per_board
    if fits >= batch:
        # Whole batch fits; still split in two when cleanly possible so the
        # "parallel" grid axis can occupy both v7x TensorCores.
        half = batch // 2
        return half if (batch % 2 == 0 and half % 8 == 0) else batch
    blk = max(8, (int(fits) // 8) * 8)
    while blk > 8 and batch % blk != 0:
        blk -= 8
    return blk if batch % blk == 0 else batch


def _pos_slab(rank_table, file_table, block_b):
    """(block_b*65, D) positional slab; row 64 of each board is zero."""
    positions = jnp.arange(64)
    pos = (rank_table[positions // 8] + file_table[positions % 8]).astype(jnp.float32)
    embed_dim = pos.shape[-1]
    slab = jnp.concatenate([pos, jnp.zeros((1, embed_dim), jnp.float32)], axis=0)
    return jnp.tile(slab, (block_b, 1))


def board_embedder(board_tokens, piece_table, rank_table, file_table, *,
                   block_b=None):
    """Forward pass of BoardEmbedder.  Returns (B, 65, D) float32."""
    batch, seq = board_tokens.shape
    vocab, embed_dim = piece_table.shape
    assert seq == SEQ_LEN and vocab == VOCAB_SIZE

    if block_b is None:
        block_b = _pick_block_b(batch, embed_dim)
    assert batch % block_b == 0
    assert block_b % 8 == 0 or block_b == batch, (
        "batch tile must be a multiple of 8 or the full batch")

    grid = (batch // block_b,)
    rows_total = batch * SEQ_LEN
    rows_tile = block_b * SEQ_LEN

    tok_flat = board_tokens.reshape(rows_total, 1).astype(jnp.int32)
    table_f32 = piece_table.astype(jnp.float32)
    pos_slab = _pos_slab(rank_table, file_table, block_b)

    out2d = pl.pallas_call(
        board_embedder_kernel,
        out_shape=jax.ShapeDtypeStruct((rows_total, embed_dim), jnp.float32),
        grid_spec=pltpu.PrefetchScalarGridSpec(
            num_scalar_prefetch=0,
            grid=grid,
            in_specs=[
                # Tokens: blocked per batch tile (aligned, tiny, auto-pipelined).
                pl.BlockSpec((rows_tile, 1), lambda i: (i, 0)),
                # Piece table: resident across all steps.
                pl.BlockSpec((VOCAB_SIZE, embed_dim), lambda i: (0, 0)),
                # Pre-tiled positional slab: resident across all steps.
                pl.BlockSpec((rows_tile, embed_dim), lambda i: (0, 0)),
            ],
            out_specs=pl.BlockSpec((rows_tile, embed_dim), lambda i: (i, 0)),
        ),
        compiler_params=pltpu.CompilerParams(
            dimension_semantics=("parallel",),
            vmem_limit_bytes=_VMEM_LIMIT_BYTES,
        ),
        cost_estimate=pl.CostEstimate(
            flops=2 * rows_total * VOCAB_SIZE * embed_dim,
            transcendentals=0,
            bytes_accessed=(rows_total * embed_dim * 4       # output writeback
                            + rows_total * 4                 # tokens
                            + (VOCAB_SIZE + rows_tile) * embed_dim * 4),
        ),
    )(tok_flat, table_f32, pos_slab)

    return out2d.reshape(batch, SEQ_LEN, embed_dim)


def reference(board_tokens, piece_table, rank_table, file_table):
    """Pure-JAX reference mirroring the PyTorch forward."""
    x = jnp.take(piece_table.astype(jnp.float32), board_tokens, axis=0)
    positions = jnp.arange(64)
    pos_emb = (rank_table[positions // 8] + file_table[positions % 8]).astype(jnp.float32)
    return x.at[:, :64, :].add(pos_emb[None, :, :])


def _run_case(key, batch, embed_dim):
    k_tok, k_piece, k_rank, k_file = jax.random.split(key, 4)
    piece_table = jax.random.normal(k_piece, (VOCAB_SIZE, embed_dim), jnp.float32)
    rank_table = jax.random.normal(k_rank, (8, embed_dim), jnp.float32)
    file_table = jax.random.normal(k_file, (8, embed_dim), jnp.float32)
    board_tokens = jax.random.randint(k_tok, (batch, SEQ_LEN), 0, VOCAB_SIZE,
                                      dtype=jnp.int32)

    out = board_embedder(board_tokens, piece_table, rank_table, file_table)
    out = jax.block_until_ready(out)

    expected = reference(board_tokens, piece_table, rank_table, file_table)
    assert out.shape == (batch, SEQ_LEN, embed_dim)
    assert jnp.allclose(out, expected, atol=1e-5, rtol=1e-5)


if __name__ == "__main__":
    key = jax.random.PRNGKey(0)
    k1, k2 = jax.random.split(key)

    # Small case (module-consistent shapes): full-extent single-tile path.
    _run_case(k1, batch=2, embed_dim=32)
    # Multiple-of-8 batch with lane-dense D: exercises the tiled, multi-step
    # grid path (block_b=8, grid=(2,)) flagged by the review.
    _run_case(k2, batch=16, embed_dim=128)

    print("KERNEL_OK")
</pallas_src>

<mosaic_0001>
module attributes {stable_mosaic.version = 11 : i64} {
  func.func @board_embedder_kernel(%arg0: i32, %arg1: memref<130x1xi32, #tpu.memory_space<vmem>>, %arg2: memref<16x32xf32, #tpu.memory_space<vmem>>, %arg3: memref<130x32xf32, #tpu.memory_space<vmem>>, %arg4: memref<130x32xf32, #tpu.memory_space<vmem>>) attributes {dimension_semantics = [#tpu.dimension_semantics<parallel>], iteration_bounds = array<i64: 1>, scalar_prefetch = 0 : i64, scratch_operands = 0 : i64, tpu.core_type = #tpu.core_type<tc>, window_params = [{transform_indices = @transform_0, window_bounds = array<i64: 130, 1>}, {pipeline_mode = #tpu.pipeline_mode<synchronous>, transform_indices = @transform_1, window_bounds = array<i64: 16, 32>}, {pipeline_mode = #tpu.pipeline_mode<synchronous>, transform_indices = @transform_2, window_bounds = array<i64: 130, 32>}, {transform_indices = @transform_3, window_bounds = array<i64: 130, 32>}]} {
    %0 = tpu.iota {dimensions = array<i32: 1>} : vector<130x16xi32>
    %c0 = arith.constant 0 : index
    %c0_0 = arith.constant 0 : index
    %1 = vector.load %arg1[%c0, %c0_0] : memref<130x1xi32, #tpu.memory_space<vmem>>, vector<130x1xi32>
    %2 = vector.broadcast %1 : vector<130x1xi32> to vector<130x16xi32>
    %3 = arith.cmpi eq, %0, %2 : vector<130x16xi32>
    %4 = arith.extui %3 : vector<130x16xi1> to vector<130x16xi32>
    %5 = arith.sitofp %4 : vector<130x16xi32> to vector<130x16xf32>
    %c0_1 = arith.constant 0 : index
    %c0_2 = arith.constant 0 : index
    %6 = vector.load %arg2[%c0_1, %c0_2] : memref<16x32xf32, #tpu.memory_space<vmem>>, vector<16x32xf32>
    %cst = arith.constant dense<0.000000e+00> : vector<130x32xf32>
    %7 = tpu.matmul %5, %6, %cst {dimension_numbers = #tpu.dot_dimension_numbers<[1], [0], [0], [1], [0, 0, 1, 1], [], []>} : vector<130x16xf32>, vector<16x32xf32>, vector<130x32xf32> -> vector<130x32xf32>
    %c0_3 = arith.constant 0 : index
    %c0_4 = arith.constant 0 : index
    %8 = vector.load %arg3[%c0_3, %c0_4] : memref<130x32xf32, #tpu.memory_space<vmem>>, vector<130x32xf32>
    %9 = arith.addf %7, %8 : vector<130x32xf32>
    %c0_5 = arith.constant 0 : index
    %c0_6 = arith.constant 0 : index
    %10 = vector.load %arg4[%c0_5, %c0_6] : memref<130x32xf32, #tpu.memory_space<vmem>>, vector<130x32xf32>
    tpu.vector_store %arg4[%c0_5, %c0_6], %9 {strides = array<i32>} : memref<130x32xf32, #tpu.memory_space<vmem>>, vector<130x32xf32>,
    return
  }
  func.func @transform_0(%arg0: i32) -> (i32, i32) {
    %c0_i32 = arith.constant 0 : i32
    %c0_i32_0 = arith.constant 0 : i32
    return %arg0, %c0_i32 : i32, i32
  }
  func.func @transform_1(%arg0: i32) -> (i32, i32) {
    %c0_i32 = arith.constant 0 : i32
    %c0_i32_0 = arith.constant 0 : i32
    %c0_i32_1 = arith.constant 0 : i32
    return %c0_i32, %c0_i32_0 : i32, i32
  }
  func.func @transform_2(%arg0: i32) -> (i32, i32) {
    %c0_i32 = arith.constant 0 : i32
    %c0_i32_0 = arith.constant 0 : i32
    %c0_i32_1 = arith.constant 0 : i32
    return %c0_i32, %c0_i32_0 : i32, i32
  }
  func.func @transform_3(%arg0: i32) -> (i32, i32) {
    %c0_i32 = arith.constant 0 : i32
    %c0_i32_0 = arith.constant 0 : i32
    return %arg0, %c0_i32 : i32, i32
  }
}

</mosaic_0001>

<llo_original>
// kernel: tpu_custom_call.1
$region0: #{tpu_custom_call.1}
  #allocation0 [shape = 'u32[]', space=smem, size = 0x4, offset = 0x4, fixed_abs, tag = 'smem constant byte address 0x4 - core index']
  #allocation1 [shape = 'u32[144,128]{1,0:T(1,128)}', space=vmem, size = 0x12000, scoped, tag = 'internal scratch']
  %s0 = inlined_call_operand.vmem [shape: s32[130,1], index: 0, kind: input, shape index: {}]
  %s1 = inlined_call_operand.vmem [shape: f32[16,32], index: 1, kind: input, shape index: {}]
  %s2 = inlined_call_operand.vmem [shape: f32[130,32], index: 2, kind: input, shape index: {}]
  %s3 = inlined_call_operand.vmem [shape: f32[130,32], index: 3, kind: output, shape index: {}]
  %s4 = sld [smem:[#allocation0]]
  $region22: #{tpu_custom_call.1} parent=0
    _
  %s6 = ssub.s32 1, %s4
  %s7 = scalar_select 0, %s6, %s4
  // Predicated region
  $region2: #{tpu_custom_call.1} parent=0 // pred_check
    _
  $region3: #{tpu_custom_call.1} parent=0 // pred_check_branch
    %9 = sbr.rel (0) target = $region5
  $region4: #{tpu_custom_call.1} parent=0 // pred_region
    _
  $region5: #{tpu_custom_call.1} parent=0 // pred_fallthru
    _
  // Predicated region
  $region6: #{tpu_custom_call.1} parent=0 // pred_check
    _
  $region7: #{tpu_custom_call.1} parent=0 // pred_check_branch
    %11 = sbr.rel (0) target = $region9
  $region8: #{tpu_custom_call.1} parent=0 // pred_region
    _
  $region9: #{tpu_custom_call.1} parent=0 // pred_fallthru
    _
  // Predicated region
  $region10: #{tpu_custom_call.1} parent=0 // pred_check
    _
  $region11: #{tpu_custom_call.1} parent=0 // pred_check_branch
    %13 = sbr.rel (0) target = $region13
  $region12: #{tpu_custom_call.1} parent=0 // pred_region
    _
  $region13: #{tpu_custom_call.1} parent=0 // pred_fallthru
    _
  %v14 = vlaneseq
  %v15 = vand.u32 %v14, 127
  %v16 = vld [vmem:[%s0] sm:$0xff]
  %v17 = vld [vmem:[%s0 + $0x8] sm:$0xff]
  %v18 = vld [vmem:[%s0 + $0x10] sm:$0xff]
  %v19 = vld [vmem:[%s0 + $0x18] sm:$0xff]
  %v20 = vld [vmem:[%s0 + $0x20] sm:$0xff]
  %v21 = vld [vmem:[%s0 + $0x28] sm:$0xff]
  %v22 = vld [vmem:[%s0 + $0x30] sm:$0xff]
  %v23 = vld [vmem:[%s0 + $0x38] sm:$0xff]
  %v24 = vld [vmem:[%s0 + $0x40] sm:$0xff]
  %v25 = vld [vmem:[%s0 + $0x48] sm:$0xff]
  %v26 = vld [vmem:[%s0 + $0x50] sm:$0xff]
  %v27 = vld [vmem:[%s0 + $0x58] sm:$0xff]
  %v28 = vld [vmem:[%s0 + $0x60] sm:$0xff]
  %v29 = vld [vmem:[%s0 + $0x68] sm:$0xff]
  %v30 = vld [vmem:[%s0 + $0x70] sm:$0xff]
  %v31 = vld [vmem:[%s0 + $0x78] sm:$0xff]
  %v32 = vld [vmem:[%s0 + $0x80] sm:$0x3]
  %33 = vset.pattern.permute.xlu0 0
  %34 = vperm.xlu0 %33, %v16
  %v35 = vpop.permute.xlu0 %34
  %36 = vset.pattern.permute.xlu0 0
  %37 = vperm.xlu0 %36, %v17
  %v38 = vpop.permute.xlu0 %37
  %39 = vset.pattern.permute.xlu0 0
  %40 = vperm.xlu0 %39, %v18
  %v41 = vpop.permute.xlu0 %40
  %42 = vset.pattern.permute.xlu0 0
  %43 = vperm.xlu0 %42, %v19
  %v44 = vpop.permute.xlu0 %43
  %45 = vset.pattern.permute.xlu0 0
  %46 = vperm.xlu0 %45, %v20
  %v47 = vpop.permute.xlu0 %46
  %48 = vset.pattern.permute.xlu0 0
  %49 = vperm.xlu0 %48, %v21
  %v50 = vpop.permute.xlu0 %49
  %51 = vset.pattern.permute.xlu0 0
  %52 = vperm.xlu0 %51, %v22
  %v53 = vpop.permute.xlu0 %52
  %54 = vset.pattern.permute.xlu0 0
  %55 = vperm.xlu0 %54, %v23
  %v56 = vpop.permute.xlu0 %55
  %57 = vset.pattern.permute.xlu0 0
  %58 = vperm.xlu0 %57, %v24
  %v59 = vpop.permute.xlu0 %58
  %60 = vset.pattern.permute.xlu0 0
  %61 = vperm.xlu0 %60, %v25
  %v62 = vpop.permute.xlu0 %61
  %63 = vset.pattern.permute.xlu0 0
  %64 = vperm.xlu0 %63, %v26
  %v65 = vpop.permute.xlu0 %64
  %66 = vset.pattern.permute.xlu0 0
  %67 = vperm.xlu0 %66, %v27
  %v68 = vpop.permute.xlu0 %67
  %69 = vset.pattern.permute.xlu0 0
  %70 = vperm.xlu0 %69, %v28
  %v71 = vpop.permute.xlu0 %70
  %72 = vset.pattern.permute.xlu0 0
  %73 = vperm.xlu0 %72, %v29
  %v74 = vpop.permute.xlu0 %73
  %75 = vset.pattern.permute.xlu0 0
  %76 = vperm.xlu0 %75, %v30
  %v77 = vpop.permute.xlu0 %76
  %78 = vset.pattern.permute.xlu0 0
  %79 = vperm.xlu0 %78, %v31
  %v80 = vpop.permute.xlu0 %79
  %81 = vset.pattern.permute.xlu0 0
  %82 = vperm.xlu0 %81, %v32
  %v83 = vpop.permute.xlu0 %82
  %vm84 = vcmp.eq.s32.totalorder %v15, %v35
  %vm85 = vcmp.eq.s32.totalorder %v15, %v38
  %vm86 = vcmp.eq.s32.totalorder %v15, %v41
  %vm87 = vcmp.eq.s32.totalorder %v15, %v44
  %vm88 = vcmp.eq.s32.totalorder %v15, %v47
  %vm89 = vcmp.eq.s32.totalorder %v15, %v50
  %vm90 = vcmp.eq.s32.totalorder %v15, %v53
  %vm91 = vcmp.eq.s32.totalorder %v15, %v56
  %vm92 = vcmp.eq.s32.totalorder %v15, %v59
  %vm93 = vcmp.eq.s32.totalorder %v15, %v62
  %vm94 = vcmp.eq.s32.totalorder %v15, %v65
  %vm95 = vcmp.eq.s32.totalorder %v15, %v68
  %vm96 = vcmp.eq.s32.totalorder %v15, %v71
  %vm97 = vcmp.eq.s32.totalorder %v15, %v74
  %vm98 = vcmp.eq.s32.totalorder %v15, %v77
  %vm99 = vcmp.eq.s32.totalorder %v15, %v80
  %vm100 = vcmp.eq.s32.totalorder %v15, %v83
  %v101 = vsel %vm84, 1, 0
  %v102 = vsel %vm85, 1, 0
  %v103 = vsel %vm86, 1, 0
  %v104 = vsel %vm87, 1, 0
  %v105 = vsel %vm88, 1, 0
  %v106 = vsel %vm89, 1, 0
  %v107 = vsel %vm90, 1, 0
  %v108 = vsel %vm91, 1, 0
  %v109 = vsel %vm92, 1, 0
  %v110 = vsel %vm93, 1, 0
  %v111 = vsel %vm94, 1, 0
  %v112 = vsel %vm95, 1, 0
  %v113 = vsel %vm96, 1, 0
  %v114 = vsel %vm97, 1, 0
  %v115 = vsel %vm98, 1, 0
  %v116 = vsel %vm99, 1, 0
  %v117 = vsel %vm100, 1, 0
  %v118 = vcvt.s32.f32 %v101
  %v119 = vcvt.s32.f32 %v102
  %v120 = vcvt.s32.f32 %v103
  %v121 = vcvt.s32.f32 %v104
  %v122 = vcvt.s32.f32 %v105
  %v123 = vcvt.s32.f32 %v106
  %v124 = vcvt.s32.f32 %v107
  %v125 = vcvt.s32.f32 %v108
  %v126 = vcvt.s32.f32 %v109
  %v127 = vcvt.s32.f32 %v110
  %v128 = vcvt.s32.f32 %v111
  %v129 = vcvt.s32.f32 %v112
  %v130 = vcvt.s32.f32 %v113
  %v131 = vcvt.s32.f32 %v114
  %v132 = vcvt.s32.f32 %v115
  %v133 = vcvt.s32.f32 %v116
  %v134 = vcvt.s32.f32 %v117
  %v135 = vld [vmem:[%s1] sm:$0xff]
  %v136 = vld [vmem:[%s1 + $0x8] sm:$0xff]
  %v137 = vld [vmem:[%s2] sm:$0xff]
  %v138 = vld [vmem:[%s2 + $0x8] sm:$0xff]
  %v139 = vld [vmem:[%s2 + $0x10] sm:$0xff]
  %v140 = vld [vmem:[%s2 + $0x18] sm:$0xff]
  %v141 = vld [vmem:[%s2 + $0x20] sm:$0xff]
  %v142 = vld [vmem:[%s2 + $0x28] sm:$0xff]
  %v143 = vld [vmem:[%s2 + $0x30] sm:$0xff]
  %v144 = vld [vmem:[%s2 + $0x38] sm:$0xff]
  %v145 = vld [vmem:[%s2 + $0x40] sm:$0xff]
  %v146 = vld [vmem:[%s2 + $0x48] sm:$0xff]
  %v147 = vld [vmem:[%s2 + $0x50] sm:$0xff]
  %v148 = vld [vmem:[%s2 + $0x58] sm:$0xff]
  %v149 = vld [vmem:[%s2 + $0x60] sm:$0xff]
  %v150 = vld [vmem:[%s2 + $0x68] sm:$0xff]
  %v151 = vld [vmem:[%s2 + $0x70] sm:$0xff]
  %v152 = vld [vmem:[%s2 + $0x78] sm:$0xff]
  %v153 = vld [vmem:[%s2 + $0x80] sm:$0x3]
  %vm154 = vcmask 130048
  %v156 = vsel %vm154, %v118, 0
  %v159 = vsel %vm154, %v119, 0
  %v162 = vsel %vm154, %v120, 0
  %v165 = vsel %vm154, %v121, 0
  %v168 = vsel %vm154, %v122, 0
  %v171 = vsel %vm154, %v123, 0
  %v174 = vsel %vm154, %v124, 0
  %v177 = vsel %vm154, %v125, 0
  %v180 = vsel %vm154, %v126, 0
  %v183 = vsel %vm154, %v127, 0
  %v186 = vsel %vm154, %v128, 0
  %v189 = vsel %vm154, %v129, 0
  %v192 = vsel %vm154, %v130, 0
  %v195 = vsel %vm154, %v131, 0
  %v198 = vsel %vm154, %v132, 0
  %v201 = vsel %vm154, %v133, 0
  %v204 = vsel %vm154, %v134, 0
  %206 = vmatprep.subr.mxu0 0.0
  %207 = vmatpush1.msra.mxu0 %v135
  %208 = vmatprep.subr.mxu0 0.0
  %209 = vmatpush1.msra.mxu0 %v136
  %210 = vmatprep.subr.mxu0 0.0
  %211 = vmatpush1.msra.mxu0 0.0
  %212 = vmatprep.subr.mxu0 0.0
  %213 = vmatpush1.msra.mxu0 0.0
  %214 = vmatprep.subr.mxu0 0.0
  %215 = vmatpush1.msra.mxu0 0.0
  %216 = vmatprep.subr.mxu0 0.0
  %217 = vmatpush1.msra.mxu0 0.0
  %218 = vmatprep.subr.mxu0 0.0
  %219 = vmatpush1.msra.mxu0 0.0
  %220 = vmatprep.subr.mxu0 0.0
  %221 = vmatpush1.msra.mxu0 0.0
  %222 = vmatprep.subr.mxu0 0.0
  %223 = vmatpush1.msra.mxu0 0.0
  %224 = vmatprep.subr.mxu0 0.0
  %225 = vmatpush1.msra.mxu0 0.0
  %226 = vmatprep.subr.mxu0 0.0
  %227 = vmatpush1.msra.mxu0 0.0
  %228 = vmatprep.subr.mxu0 0.0
  %229 = vmatpush1.msra.mxu0 0.0
  %230 = vmatprep.subr.mxu0 0.0
  %231 = vmatpush1.msra.mxu0 0.0
  %232 = vmatprep.subr.mxu0 0.0
  %233 = vmatpush1.msra.mxu0 0.0
  %234 = vmatprep.subr.mxu0 0.0
  %235 = vmatpush1.msra.mxu0 0.0
  %236 = vmatprep.subr.mxu0 0.0
  %237 = vmatpush1.msra.mxu0 0.0
  %238 = vmatprep.subr.mxu0 0.0
  %239 = vmatpush1.msra.mxu0 0.0
  %240 = vmatprep.subr.mxu0 0.0
  %241 = vmatpush1.msra.mxu0 0.0
  %242 = vmatprep.subr.mxu0 0.0
  %243 = vmatpush1.msra.mxu0 0.0
  %244 = vmatprep.subr.mxu0 0.0
  %245 = vmatpush1.msra.mxu0 0.0
  %246 = vmatprep.subr.mxu0 0.0
  %247 = vmatpush1.msra.mxu0 0.0
  %248 = vmatprep.subr.mxu0 0.0
  %249 = vmatpush1.msra.mxu0 0.0
  %250 = vmatprep.subr.mxu0 0.0
  %251 = vmatpush1.msra.mxu0 0.0
  %252 = vmatprep.subr.mxu0 0.0
  %253 = vmatpush1.msra.mxu0 0.0
  %254 = vmatprep.subr.mxu0 0.0
  %255 = vmatpush1.msra.mxu0 0.0
  %256 = vmatprep.subr.mxu0 0.0
  %257 = vmatpush1.msra.mxu0 0.0
  %258 = vmatprep.subr.mxu0 0.0
  %259 = vmatpush1.msra.mxu0 0.0
  %260 = vmatprep.subr.mxu0 0.0
  %261 = vmatpush1.msra.mxu0 0.0
  %262 = vmatprep.subr.mxu0 0.0
  %263 = vmatpush1.msra.mxu0 0.0
  %264 = vmatprep.subr.mxu0 0.0
  %265 = vmatpush1.msra.mxu0 0.0
  %266 = vmatprep.subr.mxu0 0.0
  %267 = vmatpush1.msra.mxu0 0.0
  %268 = vmatprep.subr.mxu0 0.0
  %269 = vmatpush1.msra.mxu0 0.0
  %270 = vmatprep.mubr.f32.mxu0 0.0
  %271 = vmatmul.mubr.f32.gmra.mrb[0].mxu0 %v156
  %v272 = vpop.f32.mrb[0].mxu0
  %v273 = vadd.f32 %v137, %v272
  %v274 = vpop.f32.mrb[0].mxu0
  %275 = vmatprep.mubr.f32.mxu0 0.0
  %276 = vmatmul.mubr.f32.gmra.mrb[0].mxu0 %v159
  %v277 = vpop.f32.mrb[0].mxu0
  %v278 = vadd.f32 %v138, %v277
  %v279 = vpop.f32.mrb[0].mxu0
  %280 = vmatprep.mubr.f32.mxu0 0.0
  %281 = vmatmul.mubr.f32.gmra.mrb[0].mxu0 %v162
  %v282 = vpop.f32.mrb[0].mxu0
  %v283 = vadd.f32 %v139, %v282
  %v284 = vpop.f32.mrb[0].mxu0
  %285 = vmatprep.mubr.f32.mxu0 0.0
  %286 = vmatmul.mubr.f32.gmra.mrb[0].mxu0 %v165
  %v287 = vpop.f32.mrb[0].mxu0
  %v288 = vadd.f32 %v140, %v287
  %v289 = vpop.f32.mrb[0].mxu0
  %290 = vmatprep.mubr.f32.mxu0 0.0
  %291 = vmatmul.mubr.f32.gmra.mrb[0].mxu0 %v168
  %v292 = vpop.f32.mrb[0].mxu0
  %v293 = vadd.f32 %v141, %v292
  %v294 = vpop.f32.mrb[0].mxu0
  %295 = vmatprep.mubr.f32.mxu0 0.0
  %296 = vmatmul.mubr.f32.gmra.mrb[0].mxu0 %v171
  %v297 = vpop.f32.mrb[0].mxu0
  %v298 = vadd.f32 %v142, %v297
  %v299 = vpop.f32.mrb[0].mxu0
  %300 = vmatprep.mubr.f32.mxu0 0.0
  %301 = vmatmul.mubr.f32.gmra.mrb[0].mxu0 %v174
  %v302 = vpop.f32.mrb[0].mxu0
  %v303 = vadd.f32 %v143, %v302
  %v304 = vpop.f32.mrb[0].mxu0
  %305 = vmatprep.mubr.f32.mxu0 0.0
  %306 = vmatmul.mubr.f32.gmra.mrb[0].mxu0 %v177
  %v307 = vpop.f32.mrb[0].mxu0
  %v308 = vadd.f32 %v144, %v307
  %v309 = vpop.f32.mrb[0].mxu0
  %310 = vmatprep.mubr.f32.mxu0 0.0
  %311 = vmatmul.mubr.f32.gmra.mrb[0].mxu0 %v180
  %v312 = vpop.f32.mrb[0].mxu0
  %v313 = vadd.f32 %v145, %v312
  %v314 = vpop.f32.mrb[0].mxu0
  %315 = vmatprep.mubr.f32.mxu0 0.0
  %316 = vmatmul.mubr.f32.gmra.mrb[0].mxu0 %v183
  %v317 = vpop.f32.mrb[0].mxu0
  %v318 = vadd.f32 %v146, %v317
  %v319 = vpop.f32.mrb[0].mxu0
  %320 = vmatprep.mubr.f32.mxu0 0.0
  %321 = vmatmul.mubr.f32.gmra.mrb[0].mxu0 %v186
  %v322 = vpop.f32.mrb[0].mxu0
  %v323 = vadd.f32 %v147, %v322
  %v324 = vpop.f32.mrb[0].mxu0
  %325 = vmatprep.mubr.f32.mxu0 0.0
  %326 = vmatmul.mubr.f32.gmra.mrb[0].mxu0 %v189
  %v327 = vpop.f32.mrb[0].mxu0
  %v328 = vadd.f32 %v148, %v327
  %v329 = vpop.f32.mrb[0].mxu0
  %330 = vmatprep.mubr.f32.mxu0 0.0
  %331 = vmatmul.mubr.f32.gmra.mrb[0].mxu0 %v192
  %v332 = vpop.f32.mrb[0].mxu0
  %v333 = vadd.f32 %v149, %v332
  %v334 = vpop.f32.mrb[0].mxu0
  %335 = vmatprep.mubr.f32.mxu0 0.0
  %336 = vmatmul.mubr.f32.gmra.mrb[0].mxu0 %v195
  %v337 = vpop.f32.mrb[0].mxu0
  %v338 = vadd.f32 %v150, %v337
  %v339 = vpop.f32.mrb[0].mxu0
  %340 = vmatprep.mubr.f32.mxu0 0.0
  %341 = vmatmul.mubr.f32.gmra.mrb[0].mxu0 %v198
  %v342 = vpop.f32.mrb[0].mxu0
  %v343 = vadd.f32 %v151, %v342
  %v344 = vpop.f32.mrb[0].mxu0
  %345 = vmatprep.mubr.f32.mxu0 0.0
  %346 = vmatmul.mubr.f32.gmra.mrb[0].mxu0 %v201
  %v347 = vpop.f32.mrb[0].mxu0
  %v348 = vadd.f32 %v152, %v347
  %v349 = vpop.f32.mrb[0].mxu0
  %350 = vmatprep.mubr.f32.mxu0 0.0
  %351 = vmatmul.mubr.f32.gmra.mrb[0].mxu0 %v204
  %v352 = vpop.f32.mrb[0].mxu0
  %v353 = vadd.f32 %v153, %v352
  %v354 = vpop.f32.mrb[0].mxu0
  %355 = vdwg.mxu0
  %vm356 = vcmask 261120
  %357 = vst.msk [vmem:[%s3] sm:$0xff] %vm356, %v273
  %358 = vst.msk [vmem:[%s3 + $0x8] sm:$0xff] %vm356, %v278
  %359 = vst.msk [vmem:[%s3 + $0x10] sm:$0xff] %vm356, %v283
  %360 = vst.msk [vmem:[%s3 + $0x18] sm:$0xff] %vm356, %v288
  %361 = vst.msk [vmem:[%s3 + $0x20] sm:$0xff] %vm356, %v293
  %362 = vst.msk [vmem:[%s3 + $0x28] sm:$0xff] %vm356, %v298
  %363 = vst.msk [vmem:[%s3 + $0x30] sm:$0xff] %vm356, %v303
  %364 = vst.msk [vmem:[%s3 + $0x38] sm:$0xff] %vm356, %v308
  %365 = vst.msk [vmem:[%s3 + $0x40] sm:$0xff] %vm356, %v313
  %366 = vst.msk [vmem:[%s3 + $0x48] sm:$0xff] %vm356, %v318
  %367 = vst.msk [vmem:[%s3 + $0x50] sm:$0xff] %vm356, %v323
  %368 = vst.msk [vmem:[%s3 + $0x58] sm:$0xff] %vm356, %v328
  %369 = vst.msk [vmem:[%s3 + $0x60] sm:$0xff] %vm356, %v333
  %370 = vst.msk [vmem:[%s3 + $0x68] sm:$0xff] %vm356, %v338
  %371 = vst.msk [vmem:[%s3 + $0x70] sm:$0xff] %vm356, %v343
  %372 = vst.msk [vmem:[%s3 + $0x78] sm:$0xff] %vm356, %v348
  %vm373 = vcmask 254976
  %374 = vst.msk [vmem:[%s3 + $0x80] sm:$0x3] %vm373, %v353
  // Predicated region
  $region14: #{tpu_custom_call.1} parent=0 // pred_check
    _
  $region15: #{tpu_custom_call.1} parent=0 // pred_check_branch
    %376 = sbr.rel (0) target = $region17
  $region16: #{tpu_custom_call.1} parent=0 // pred_region
    _
  $region17: #{tpu_custom_call.1} parent=0 // pred_fallthru
    _
  // Predicated region
  $region18: #{tpu_custom_call.1} parent=0 // pred_check
    _
  $region19: #{tpu_custom_call.1} parent=0 // pred_check_branch
    %378 = sbr.rel (0) target = $region21
  $region20: #{tpu_custom_call.1} parent=0 // pred_region
    _
  $region21: #{tpu_custom_call.1} parent=0 // pred_fallthru
    _

</llo_original>
